<compile_context>
chip_gen: v5e
topology: v5e:2x2
jax: 0.10.0
libtpu: 0.0.40
codegen_flags: <defaults>
</compile_context>

<pallas_src>
from functools import partial

import numpy as np
import jax
import jax.numpy as jnp
from jax.experimental import pallas as pl
from jax.experimental.pallas import tpu as pltpu


def _round_up(x, m):
    return ((x + m - 1) // m) * m


def _device_kind():
    try:
        return jax.devices()[0].device_kind.lower()
    except Exception:
        return ""


def _choose_blocking(num_rows):
    """Pick (P_pad, block_rows) so P_pad % block_rows == 0, generation-aware."""
    p16 = _round_up(max(num_rows, 1), 16)          # bf16-friendly sublane bucket
    if "v7" in _device_kind():
        # 2 TensorCores / chip, 64 MiB VMEM: keep >=2 grid steps once P grows.
        if p16 < 256:
            block_rows = p16
        elif p16 <= 512:
            block_rows = _round_up((p16 + 1) // 2, 16)
        else:
            block_rows = 256
    else:
        # Single TC (v5e/v6e): fat tiles amortize the ~0.35 us per-step cost.
        block_rows = p16 if p16 <= 2048 else 2048
    p_pad = _round_up(p16, block_rows)
    return p_pad, block_rows


def _const_block_spec(shape):
    """Single-buffered BlockSpec for a grid-invariant (weight/bias) operand."""
    index_map = lambda i: (0, 0)
    try:
        return pl.BlockSpec(shape, index_map, pipeline_mode=pl.Buffered(1))
    except Exception:  # older jax: fall back to default double buffering
        return pl.BlockSpec(shape, index_map)


# ----------------------------------------------------------------------------
# Pallas kernel: fused 3-layer MLP (Linear+ReLU x3) + sigmoid head.
#   lat_ref : pheno_latent (post-ReLU of layer_out),  (block_rows, O_pad) f32
#   sig_ref : sigmoid(pheno_latent),                  (block_rows, O_pad) f32
# ----------------------------------------------------------------------------
def _pheno_mlp_kernel(x_ref, w1_ref, b1_ref, w2_ref, b2_ref, w3_ref, b3_ref,
                      lat_ref, sig_ref):
    x = x_ref[...].astype(w1_ref.dtype)                              # f32 -> bf16 in-kernel
    h = jnp.dot(x, w1_ref[...], preferred_element_type=jnp.float32) + b1_ref[...]
    h = jnp.maximum(h, 0.0)                                          # layer_in (f32)
    h = h.astype(w2_ref.dtype)                                       # bf16 for MXU
    h = jnp.dot(h, w2_ref[...], preferred_element_type=jnp.float32) + b2_ref[...]
    h = jnp.maximum(h, 0.0)                                          # layer2 (f32)
    h = h.astype(w3_ref.dtype)
    lat = jnp.dot(h, w3_ref[...], preferred_element_type=jnp.float32) + b3_ref[...]
    lat = jnp.maximum(lat, 0.0)                                      # layer_out ReLU
    lat_ref[...] = lat                                               # pheno_latent
    sig_ref[...] = jax.nn.sigmoid(lat)                               # sigmoid_layer


@partial(jax.jit, static_argnames=("block_rows",))
def _pheno_mlp_call(x_rows, params, *, block_rows):
    """x_rows: (P_pad, F) f32 (F may be < F_pad).  Returns (sigmoid, latent), padded."""
    w1, b1, w2, b2, w3, b3 = params
    p_pad, f = x_rows.shape
    f_pad, h_pad = w1.shape
    o_pad = w3.shape[1]

    if f != f_pad:                                   # pad feature dim on-device
        x_rows = jnp.pad(x_rows, ((0, 0), (0, f_pad - f)))

    grid = (p_pad // block_rows,)

    # VMEM budget from actual tile footprint (weights single-buffered,
    # x / outputs double-buffered) + activation headroom.
    w_bytes = (f_pad * h_pad + h_pad * h_pad + h_pad * o_pad) * 2      # bf16
    b_bytes = (2 * h_pad + o_pad) * 4
    x_bytes = 2 * block_rows * f_pad * 4
    o_bytes = 2 * 2 * block_rows * o_pad * 4
    act_bytes = 2 * block_rows * max(h_pad, o_pad) * 4
    vmem_bytes = w_bytes + b_bytes + x_bytes + o_bytes + act_bytes + (4 << 20)
    vmem_cap = (60 << 20) if "v7" in _device_kind() else (110 << 20)
    vmem_limit = int(min(max(vmem_bytes, 16 << 20), vmem_cap))

    flops = 2 * p_pad * (f_pad * h_pad + h_pad * h_pad + h_pad * o_pad)
    bytes_accessed = p_pad * f_pad * 4 + w_bytes + b_bytes + 2 * p_pad * o_pad * 4

    lat, sig = pl.pallas_call(
        _pheno_mlp_kernel,
        out_shape=(jax.ShapeDtypeStruct((p_pad, o_pad), jnp.float32),
                   jax.ShapeDtypeStruct((p_pad, o_pad), jnp.float32)),
        grid_spec=pltpu.PrefetchScalarGridSpec(
            num_scalar_prefetch=0,
            grid=grid,
            in_specs=[
                pl.BlockSpec((block_rows, f_pad), lambda i: (i, 0)),   # x (f32)
                _const_block_spec((f_pad, h_pad)),                     # w1
                _const_block_spec((1, h_pad)),                         # b1
                _const_block_spec((h_pad, h_pad)),                     # w2
                _const_block_spec((1, h_pad)),                         # b2
                _const_block_spec((h_pad, o_pad)),                     # w3
                _const_block_spec((1, o_pad)),                         # b3
            ],
            out_specs=[
                pl.BlockSpec((block_rows, o_pad), lambda i: (i, 0)),   # latent
                pl.BlockSpec((block_rows, o_pad), lambda i: (i, 0)),   # sigmoid
            ],
        ),
        compiler_params=pltpu.CompilerParams(
            dimension_semantics=("parallel",),
            vmem_limit_bytes=vmem_limit),
        cost_estimate=pl.CostEstimate(
            flops=int(flops),
            transcendentals=int(p_pad * o_pad),
            bytes_accessed=int(bytes_accessed)),
    )(x_rows, w1, b1, w2, b2, w3, b3)

    return sig, lat


# ----------------------------------------------------------------------------
# Host-side translation of PhenotypeNet._transform_to_patient_task_means,
# vectorized (no Python loops over patients/tasks) but semantically identical
# to the original, including:
#  * patient_ids[p_id] (p_id-th row of the *filtered* array) is used as the
#    reference id — mirrors the original exactly (inherited quirk).
#  * per-task global mean is NaN when a task has zero surviving samples
#    (torch.mean over empty), faithful to the reference.
# ----------------------------------------------------------------------------
def transform_to_patient_task_means(motion_z, tasks, tasks_mask, patient_ids,
                                    phenos, phenos_mask, task_dim, motion_z_dim):
    true_mask = (tasks_mask == 1) & (~np.isnan(patient_ids)) & (phenos_mask == 1)
    sliced_z = np.asarray(motion_z, dtype=np.float32)[true_mask]     # (n, D)
    tasks = np.asarray(tasks)[true_mask]                             # (n,)
    phenos = np.asarray(phenos)[true_mask]                           # (n, num_phenos)
    patient_ids = np.asarray(patient_ids)[true_mask]                 # (n,)

    uni_patients = np.unique(patient_ids)
    num_uni_patients = uni_patients.shape[0]

    # NOTE: mirrors the original exactly — it indexes patient_ids[p_id], not
    # uni_patients[p_id].
    ref_ids = patient_ids[:num_uni_patients]                         # (P,)

    match = (patient_ids[None, :] == ref_ids[:, None])               # (P, n)
    task_oh = (tasks[None, :] == np.arange(task_dim)[:, None])       # (T, n)
    match_f = match.astype(np.float32)
    task_f = task_oh.astype(np.float32)

    # task_assigner: per-task global means (NaN when empty — faithful).
    task_counts = task_f.sum(axis=1)                                 # (T,)
    task_sums = task_f @ sliced_z                                    # (T, D)
    with np.errstate(invalid="ignore", divide="ignore"):
        aver_tasks_all = task_sums / task_counts[:, None]

    # patient_assigner: per-(patient, task) means with per-task fallback.
    counts = np.einsum("pn,tn->pt", match_f, task_f)                 # (P, T)
    sums = np.einsum("pn,tn,nd->ptd", match_f, task_f, sliced_z)     # (P, T, D)
    with np.errstate(invalid="ignore", divide="ignore"):
        means = sums / counts[..., None]
    fp3 = np.where(counts[..., None] > 0, means,
                   aver_tasks_all[None, :, :]).astype(np.float32)    # (P, T, D)

    # first-occurrence phenotype label per (quirky) unique patient.
    first_idx = np.argmax(match, axis=1)                             # first True index
    phenos_labels = phenos[first_idx]

    fingerprint = fp3.reshape(num_uni_patients, -1)
    return fingerprint, np.asarray(phenos_labels)


# ----------------------------------------------------------------------------
# PhenotypeNet wrapper
# ----------------------------------------------------------------------------
class PhenotypeNetPallas:
    def __init__(self, num_phenos, motion_z_dim, task_dim, hidden_dim, key,
                 weight_dtype=jnp.bfloat16):
        self.num_phenos = num_phenos
        self.motion_z_dim = motion_z_dim
        self.task_dim = task_dim
        self.hidden_dim = hidden_dim
        self.fingerprint_dim = motion_z_dim * task_dim

        # Lane-dense padded dims (multiples of 128); zero-padding is exact.
        self.F_pad = _round_up(self.fingerprint_dim, 128)
        self.H_pad = _round_up(hidden_dim, 128)
        self.O_pad = _round_up(num_phenos, 128)

        ks = jax.random.split(key, 6)

        def linear_init(kw, kb, fan_in, fan_out, pad_in, pad_out):
            bound = 1.0 / np.sqrt(fan_in)
            w = jax.random.uniform(kw, (fan_in, fan_out), jnp.float32, -bound, bound)
            b = jax.random.uniform(kb, (1, fan_out), jnp.float32, -bound, bound)
            w_p = jnp.zeros((pad_in, pad_out), jnp.float32).at[:fan_in, :fan_out].set(w)
            b_p = jnp.zeros((1, pad_out), jnp.float32).at[:, :fan_out].set(b)
            # weights in bf16 (MXU inputs), biases in f32 (VPU elementwise).
            return w_p.astype(weight_dtype), b_p

        w1, b1 = linear_init(ks[0], ks[1], self.fingerprint_dim, hidden_dim,
                             self.F_pad, self.H_pad)
        w2, b2 = linear_init(ks[2], ks[3], hidden_dim, hidden_dim,
                             self.H_pad, self.H_pad)
        w3, b3 = linear_init(ks[4], ks[5], hidden_dim, num_phenos,
                             self.H_pad, self.O_pad)
        self.params = (w1, b1, w2, b2, w3, b3)   # device-resident

    def forward(self, motion_z, tasks, tasks_mask, patient_ids, phenos, phenos_mask):
        fingerprint, uni_phenos = transform_to_patient_task_means(
            np.asarray(motion_z), np.asarray(tasks), np.asarray(tasks_mask),
            np.asarray(patient_ids), np.asarray(phenos), np.asarray(phenos_mask),
            self.task_dim, self.motion_z_dim)

        P = fingerprint.shape[0]
        P_pad, block_rows = _choose_blocking(P)

        # Only row-bucket padding on the host; feature-dim padding (if any)
        # happens on-device inside the jit — H2D carries unpadded features.
        fp_rows = np.zeros((P_pad, self.fingerprint_dim), dtype=np.float32)
        fp_rows[:P] = fingerprint

        out_full, lat_full = _pheno_mlp_call(
            jnp.asarray(fp_rows), self.params, block_rows=block_rows)

        out = out_full[:P, :self.num_phenos]
        pheno_latent = lat_full[:P, :self.num_phenos]
        return out, uni_phenos, pheno_latent


# ----------------------------------------------------------------------------
if __name__ == "__main__":
    # Small shapes consistent with the module:
    #   motion_z_dim=32, task_dim=4  -> fingerprint_dim = 128
    #   hidden_dim=64 (padded to 128), num_phenos=13 (padded to 128), N=40 samples
    num_phenos, motion_z_dim, task_dim, hidden_dim = 13, 32, 4, 64
    N = 40

    key = jax.random.PRNGKey(0)
    k_mz, k_task, k_pat, k_phe, k_params = jax.random.split(key, 5)

    # np.array(...) makes writable copies of the JAX arrays (np.asarray is read-only).
    motion_z = np.array(jax.random.normal(k_mz, (N, motion_z_dim), jnp.float32))

    tasks = np.array(jax.random.randint(k_task, (N,), 0, task_dim))
    tasks[: 2 * task_dim] = np.tile(np.arange(task_dim), 2)  # every task represented

    tasks_mask = np.ones((N,), dtype=np.int64)
    tasks_mask[30] = 0
    tasks_mask[35] = 0

    patient_ids = np.array(jax.random.randint(k_pat, (N,), 0, 6), dtype=np.float64)
    patient_ids[33] = np.nan  # a sample with unknown patient

    phenos = np.array(jax.random.bernoulli(k_phe, 0.3, (N, num_phenos))).astype(np.float32)

    phenos_mask = np.ones((N,), dtype=np.int64)
    phenos_mask[37] = 0

    net = PhenotypeNetPallas(num_phenos, motion_z_dim, task_dim, hidden_dim, k_params)
    out, uni_phenos, pheno_latent = net.forward(
        motion_z, tasks, tasks_mask, patient_ids, phenos, phenos_mask)

    out = jax.block_until_ready(out)
    pheno_latent = jax.block_until_ready(pheno_latent)

    assert out.shape == pheno_latent.shape == (uni_phenos.shape[0], num_phenos)
    assert np.all(np.isfinite(np.asarray(out)))
    assert np.all((np.asarray(out) >= 0.0) & (np.asarray(out) <= 1.0))
    print("KERNEL_OK")
</pallas_src>

<mosaic_0001>
module attributes {stable_mosaic.version = 11 : i64} {
  func.func @_pheno_mlp_kernel(%arg0: i32, %arg1: memref<16x128xf32, #tpu.memory_space<vmem>>, %arg2: memref<128x128xbf16, #tpu.memory_space<vmem>>, %arg3: memref<1x128xf32, #tpu.memory_space<vmem>>, %arg4: memref<128x128xbf16, #tpu.memory_space<vmem>>, %arg5: memref<1x128xf32, #tpu.memory_space<vmem>>, %arg6: memref<128x128xbf16, #tpu.memory_space<vmem>>, %arg7: memref<1x128xf32, #tpu.memory_space<vmem>>, %arg8: memref<16x128xf32, #tpu.memory_space<vmem>>, %arg9: memref<16x128xf32, #tpu.memory_space<vmem>>) attributes {dimension_semantics = [#tpu.dimension_semantics<parallel>], iteration_bounds = array<i64: 1>, scalar_prefetch = 0 : i64, scratch_operands = 0 : i64, tpu.core_type = #tpu.core_type<tc>, window_params = [{transform_indices = @transform_0, window_bounds = array<i64: 16, 128>}, {pipeline_mode = #tpu.pipeline_mode<synchronous>, transform_indices = @transform_1, window_bounds = array<i64: 128, 128>}, {pipeline_mode = #tpu.pipeline_mode<synchronous>, transform_indices = @transform_2, window_bounds = array<i64: 1, 128>}, {pipeline_mode = #tpu.pipeline_mode<synchronous>, transform_indices = @transform_3, window_bounds = array<i64: 128, 128>}, {pipeline_mode = #tpu.pipeline_mode<synchronous>, transform_indices = @transform_4, window_bounds = array<i64: 1, 128>}, {pipeline_mode = #tpu.pipeline_mode<synchronous>, transform_indices = @transform_5, window_bounds = array<i64: 128, 128>}, {pipeline_mode = #tpu.pipeline_mode<synchronous>, transform_indices = @transform_6, window_bounds = array<i64: 1, 128>}, {transform_indices = @transform_7, window_bounds = array<i64: 16, 128>}, {transform_indices = @transform_8, window_bounds = array<i64: 16, 128>}]} {
    %c0 = arith.constant 0 : index
    %c0_0 = arith.constant 0 : index
    %0 = vector.load %arg1[%c0, %c0_0] : memref<16x128xf32, #tpu.memory_space<vmem>>, vector<16x128xf32>
    %1 = arith.truncf %0 : vector<16x128xf32> to vector<16x128xbf16>
    %c0_1 = arith.constant 0 : index
    %c0_2 = arith.constant 0 : index
    %2 = vector.load %arg2[%c0_1, %c0_2] : memref<128x128xbf16, #tpu.memory_space<vmem>>, vector<128x128xbf16>
    %cst = arith.constant dense<0.000000e+00> : vector<16x128xf32>
    %3 = tpu.matmul %1, %2, %cst {dimension_numbers = #tpu.dot_dimension_numbers<[1], [0], [0], [1], [0, 0, 1, 1], [], []>} : vector<16x128xbf16>, vector<128x128xbf16>, vector<16x128xf32> -> vector<16x128xf32>
    %c0_3 = arith.constant 0 : index
    %c0_4 = arith.constant 0 : index
    %4 = vector.load %arg3[%c0_3, %c0_4] : memref<1x128xf32, #tpu.memory_space<vmem>>, vector<1x128xf32>
    %5 = vector.broadcast %4 : vector<1x128xf32> to vector<16x128xf32>
    %6 = arith.addf %3, %5 : vector<16x128xf32>
    %cst_5 = arith.constant 0.000000e+00 : f32
    %7 = vector.broadcast %cst_5 : f32 to vector<16x128xf32>
    %8 = arith.maximumf %6, %7 : vector<16x128xf32>
    %9 = arith.truncf %8 : vector<16x128xf32> to vector<16x128xbf16>
    %c0_6 = arith.constant 0 : index
    %c0_7 = arith.constant 0 : index
    %10 = vector.load %arg4[%c0_6, %c0_7] : memref<128x128xbf16, #tpu.memory_space<vmem>>, vector<128x128xbf16>
    %cst_8 = arith.constant dense<0.000000e+00> : vector<16x128xf32>
    %11 = tpu.matmul %9, %10, %cst_8 {dimension_numbers = #tpu.dot_dimension_numbers<[1], [0], [0], [1], [0, 0, 1, 1], [], []>} : vector<16x128xbf16>, vector<128x128xbf16>, vector<16x128xf32> -> vector<16x128xf32>
    %c0_9 = arith.constant 0 : index
    %c0_10 = arith.constant 0 : index
    %12 = vector.load %arg5[%c0_9, %c0_10] : memref<1x128xf32, #tpu.memory_space<vmem>>, vector<1x128xf32>
    %13 = vector.broadcast %12 : vector<1x128xf32> to vector<16x128xf32>
    %14 = arith.addf %11, %13 : vector<16x128xf32>
    %cst_11 = arith.constant 0.000000e+00 : f32
    %15 = vector.broadcast %cst_11 : f32 to vector<16x128xf32>
    %16 = arith.maximumf %14, %15 : vector<16x128xf32>
    %17 = arith.truncf %16 : vector<16x128xf32> to vector<16x128xbf16>
    %c0_12 = arith.constant 0 : index
    %c0_13 = arith.constant 0 : index
    %18 = vector.load %arg6[%c0_12, %c0_13] : memref<128x128xbf16, #tpu.memory_space<vmem>>, vector<128x128xbf16>
    %cst_14 = arith.constant dense<0.000000e+00> : vector<16x128xf32>
    %19 = tpu.matmul %17, %18, %cst_14 {dimension_numbers = #tpu.dot_dimension_numbers<[1], [0], [0], [1], [0, 0, 1, 1], [], []>} : vector<16x128xbf16>, vector<128x128xbf16>, vector<16x128xf32> -> vector<16x128xf32>
    %c0_15 = arith.constant 0 : index
    %c0_16 = arith.constant 0 : index
    %20 = vector.load %arg7[%c0_15, %c0_16] : memref<1x128xf32, #tpu.memory_space<vmem>>, vector<1x128xf32>
    %21 = vector.broadcast %20 : vector<1x128xf32> to vector<16x128xf32>
    %22 = arith.addf %19, %21 : vector<16x128xf32>
    %cst_17 = arith.constant 0.000000e+00 : f32
    %23 = vector.broadcast %cst_17 : f32 to vector<16x128xf32>
    %24 = arith.maximumf %22, %23 : vector<16x128xf32>
    %c0_18 = arith.constant 0 : index
    %c0_19 = arith.constant 0 : index
    %25 = vector.load %arg8[%c0_18, %c0_19] : memref<16x128xf32, #tpu.memory_space<vmem>>, vector<16x128xf32>
    tpu.vector_store %arg8[%c0_18, %c0_19], %24 {strides = array<i32>} : memref<16x128xf32, #tpu.memory_space<vmem>>, vector<16x128xf32>,
    %26 = arith.negf %24 : vector<16x128xf32>
    %27 = math.exp %26 : vector<16x128xf32>
    %cst_20 = arith.constant 1.000000e+00 : f32
    %28 = vector.broadcast %cst_20 : f32 to vector<16x128xf32>
    %29 = arith.addf %28, %27 : vector<16x128xf32>
    %30 = arith.divf %28, %29 : vector<16x128xf32>
    %c0_21 = arith.constant 0 : index
    %c0_22 = arith.constant 0 : index
    %31 = vector.load %arg9[%c0_21, %c0_22] : memref<16x128xf32, #tpu.memory_space<vmem>>, vector<16x128xf32>
    tpu.vector_store %arg9[%c0_21, %c0_22], %30 {strides = array<i32>} : memref<16x128xf32, #tpu.memory_space<vmem>>, vector<16x128xf32>,
    return
  }
  func.func @transform_0(%arg0: i32) -> (i32, i32) {
    %c0_i32 = arith.constant 0 : i32
    %c0_i32_0 = arith.constant 0 : i32
    return %arg0, %c0_i32 : i32, i32
  }
  func.func @transform_1(%arg0: i32) -> (i32, i32) {
    %c0_i32 = arith.constant 0 : i32
    %c0_i32_0 = arith.constant 0 : i32
    %c0_i32_1 = arith.constant 0 : i32
    return %c0_i32, %c0_i32_0 : i32, i32
  }
  func.func @transform_2(%arg0: i32) -> (i32, i32) {
    %c0_i32 = arith.constant 0 : i32
    %c0_i32_0 = arith.constant 0 : i32
    %c0_i32_1 = arith.constant 0 : i32
    return %c0_i32, %c0_i32_0 : i32, i32
  }
  func.func @transform_3(%arg0: i32) -> (i32, i32) {
    %c0_i32 = arith.constant 0 : i32
    %c0_i32_0 = arith.constant 0 : i32
    %c0_i32_1 = arith.constant 0 : i32
    return %c0_i32, %c0_i32_0 : i32, i32
  }
  func.func @transform_4(%arg0: i32) -> (i32, i32) {
    %c0_i32 = arith.constant 0 : i32
    %c0_i32_0 = arith.constant 0 : i32
    %c0_i32_1 = arith.constant 0 : i32
    return %c0_i32, %c0_i32_0 : i32, i32
  }
  func.func @transform_5(%arg0: i32) -> (i32, i32) {
    %c0_i32 = arith.constant 0 : i32
    %c0_i32_0 = arith.constant 0 : i32
    %c0_i32_1 = arith.constant 0 : i32
    return %c0_i32, %c0_i32_0 : i32, i32
  }
  func.func @transform_6(%arg0: i32) -> (i32, i32) {
    %c0_i32 = arith.constant 0 : i32
    %c0_i32_0 = arith.constant 0 : i32
    %c0_i32_1 = arith.constant 0 : i32
    return %c0_i32, %c0_i32_0 : i32, i32
  }
  func.func @transform_7(%arg0: i32) -> (i32, i32) {
    %c0_i32 = arith.constant 0 : i32
    %c0_i32_0 = arith.constant 0 : i32
    return %arg0, %c0_i32 : i32, i32
  }
  func.func @transform_8(%arg0: i32) -> (i32, i32) {
    %c0_i32 = arith.constant 0 : i32
    %c0_i32_0 = arith.constant 0 : i32
    return %arg0, %c0_i32 : i32, i32
  }
}

</mosaic_0001>

<llo_original>
// kernel: _pheno_mlp_call.1
$region0: #{_pheno_mlp_call.1}
  #allocation0 [shape = 'u32[]', space=smem, size = 0x4, offset = 0x4, fixed_abs, tag = 'smem constant byte address 0x4 - core index']
  #allocation1 [shape = 'u32[72,128]{1,0:T(1,128)}', space=vmem, size = 0x9000, scoped, tag = 'internal scratch']
  %s0 = inlined_call_operand.hbm [shape: f32[16,128], index: 0, kind: input, shape index: {}]
  %s1 = inlined_call_operand.hbm [shape: bf16[128,128], index: 1, kind: input, shape index: {}]
  %s2 = inlined_call_operand.vmem [shape: f32[1,128], index: 2, kind: input, shape index: {}]
  %s3 = inlined_call_operand.hbm [shape: bf16[128,128], index: 3, kind: input, shape index: {}]
  %s4 = inlined_call_operand.vmem [shape: f32[1,128], index: 4, kind: input, shape index: {}]
  %s5 = inlined_call_operand.hbm [shape: bf16[128,128], index: 5, kind: input, shape index: {}]
  %s6 = inlined_call_operand.vmem [shape: f32[1,128], index: 6, kind: input, shape index: {}]
  %s7 = inlined_call_operand.hbm [shape: f32[16,128], index: 7, kind: output, shape index: {0}]
  %s8 = inlined_call_operand.hbm [shape: f32[16,128], index: 8, kind: output, shape index: {1}]
  %9 = xla_tuple %s7, %s8
  %s10 = sld [smem:[#allocation0]]
  $region62: #{_pheno_mlp_call.1} parent=0
    _
  %s12 = ssub.s32 1, %s10
  %s13 = scalar_select 0, %s12, %s10
  $region1: #{_pheno_mlp_call.1} parent=0
    #allocation2 [shape = 'u8[8192]{0}', space=vmem, size = 0x2000, scoped, tag = 'input window, operand 0, single buffered']
    #allocation3 [shape = 's32[1]{0}', space=sflag, size = 0x4, scoped, tag = 'scoped memory for _pheno_mlp_call.1']
    #allocation4 [shape = 's32[1]{0}', space=sflag, size = 0x4, scoped, tag = 'scoped memory for _pheno_mlp_call.1']
    #allocation5 [shape = 'u8[32768]{0}', space=vmem, size = 0x8000, scoped, tag = 'input window, operand 1, single buffered']
    #allocation6 [shape = 's32[1]{0}', space=sflag, size = 0x4, scoped, tag = 'scoped memory for _pheno_mlp_call.1']
    #allocation7 [shape = 'u8[32768]{0}', space=vmem, size = 0x8000, scoped, tag = 'input window, operand 3, single buffered']
    #allocation8 [shape = 'u8[32768]{0}', space=vmem, size = 0x8000, scoped, tag = 'input window, operand 5, single buffered']
    #allocation9 [shape = 's32[1]{0}', space=sflag, size = 0x4, scoped, tag = 'scoped memory for _pheno_mlp_call.1']
    #allocation10 [shape = 'u8[8192]{0}', space=vmem, size = 0x2000, scoped, tag = 'output window, operand 0, single buffered']
    #allocation11 [shape = 'u8[8192]{0}', space=vmem, size = 0x2000, scoped, tag = 'output window, operand 1, single buffered']
    #allocation12 [shape = 's32[1]{0}', space=sflag, size = 0x4, scoped, tag = 'scoped memory for _pheno_mlp_call.1']
    %14 = vsyncpa [#allocation3], 0
    %15 = vsyncpa [#allocation6], 0
    %16 = vsyncpa [#allocation9], 0
    %17 = vsyncpa [#allocation4], 0
    %18 = vsyncpa [#allocation12], 0
    // Predicated region
    $region2: #{_pheno_mlp_call.1} parent=1 // pred_check
      _
    $region3: #{_pheno_mlp_call.1} parent=1 // pred_check_branch
      %20 = sbr.rel (0) target = $region5
    $region4: #{_pheno_mlp_call.1} parent=1 // pred_region
      %22 = vsyncadd [#allocation3], 0
      %s23 = sshll.u32 %s0, 4
      %s24 = int_to_ptr.hbm [resolvable:$true] %s23
      %s25 = sshll.u32 [#allocation2], 4
      %s26 = int_to_ptr.vmem [resolvable:$true] %s25
      %31 = dma.hbm_to_vmem [thread:$0]  %s24, 256, %s26, [#allocation3], 128, 128, 8
    $region5: #{_pheno_mlp_call.1} parent=1 // pred_fallthru
      _
    // Predicated region
    $region6: #{_pheno_mlp_call.1} parent=1 // pred_check
      _
    $region7: #{_pheno_mlp_call.1} parent=1 // pred_check_branch
      %33 = sbr.rel (0) target = $region9
    $region8: #{_pheno_mlp_call.1} parent=1 // pred_region
      %35 = vsyncadd [#allocation6], 0
      %s36 = sshll.u32 %s1, 4
      %s37 = int_to_ptr.hbm [resolvable:$true] %s36
      %s38 = sshll.u32 [#allocation5], 4
      %s39 = int_to_ptr.vmem [resolvable:$true] %s38
      %44 = dma.hbm_to_vmem [thread:$0]  %s37, 1024, %s39, [#allocation6], 64, 64, 4
    $region9: #{_pheno_mlp_call.1} parent=1 // pred_fallthru
      _
    // Predicated region
    $region10: #{_pheno_mlp_call.1} parent=1 // pred_check
      _
    $region11: #{_pheno_mlp_call.1} parent=1 // pred_check_branch
      %46 = sbr.rel (0) target = $region13
    $region12: #{_pheno_mlp_call.1} parent=1 // pred_region
      _
    $region13: #{_pheno_mlp_call.1} parent=1 // pred_fallthru
      _
    // Predicated region
    $region14: #{_pheno_mlp_call.1} parent=1 // pred_check
      _
    $region15: #{_pheno_mlp_call.1} parent=1 // pred_check_branch
      %48 = sbr.rel (0) target = $region17
    $region16: #{_pheno_mlp_call.1} parent=1 // pred_region
      %50 = vsyncadd [#allocation6], 0
      %s51 = sshll.u32 %s3, 4
      %s52 = int_to_ptr.hbm [resolvable:$true] %s51
      %s53 = sshll.u32 [#allocation7], 4
      %s54 = int_to_ptr.vmem [resolvable:$true] %s53
      %59 = dma.hbm_to_vmem [thread:$0]  %s52, 1024, %s54, [#allocation6], 64, 64, 4
    $region17: #{_pheno_mlp_call.1} parent=1 // pred_fallthru
      _
    // Predicated region
    $region18: #{_pheno_mlp_call.1} parent=1 // pred_check
      _
    $region19: #{_pheno_mlp_call.1} parent=1 // pred_check_branch
      %61 = sbr.rel (0) target = $region21
    $region20: #{_pheno_mlp_call.1} parent=1 // pred_region
      _
    $region21: #{_pheno_mlp_call.1} parent=1 // pred_fallthru
      _
    // Predicated region
    $region22: #{_pheno_mlp_call.1} parent=1 // pred_check
      _
    $region23: #{_pheno_mlp_call.1} parent=1 // pred_check_branch
      %63 = sbr.rel (0) target = $region25
    $region24: #{_pheno_mlp_call.1} parent=1 // pred_region
      %65 = vsyncadd [#allocation9], 0
      %s66 = sshll.u32 %s5, 4
      %s67 = int_to_ptr.hbm [resolvable:$true] %s66
      %s68 = sshll.u32 [#allocation8], 4
      %s69 = int_to_ptr.vmem [resolvable:$true] %s68
      %74 = dma.hbm_to_vmem [thread:$0]  %s67, 1024, %s69, [#allocation9], 64, 64, 4
    $region25: #{_pheno_mlp_call.1} parent=1 // pred_fallthru
      _
    // Predicated region
    $region26: #{_pheno_mlp_call.1} parent=1 // pred_check
      _
    $region27: #{_pheno_mlp_call.1} parent=1 // pred_check_branch
      %76 = sbr.rel (0) target = $region29
    $region28: #{_pheno_mlp_call.1} parent=1 // pred_region
      _
    $region29: #{_pheno_mlp_call.1} parent=1 // pred_fallthru
      _
    // Predicated region
    $region30: #{_pheno_mlp_call.1} parent=1 // pred_check
      _
    $region31: #{_pheno_mlp_call.1} parent=1 // pred_check_branch
      %78 = sbr.rel (0) target = $region33
    $region32: #{_pheno_mlp_call.1} parent=1 // pred_region
      %80 = dma.done [#allocation3], 256
    $region33: #{_pheno_mlp_call.1} parent=1 // pred_fallthru
      _
    // Predicated region
    $region34: #{_pheno_mlp_call.1} parent=1 // pred_check
      _
    $region35: #{_pheno_mlp_call.1} parent=1 // pred_check_branch
      %82 = sbr.rel (0) target = $region37
    $region36: #{_pheno_mlp_call.1} parent=1 // pred_region
      %84 = dma.done [#allocation6], 1024
    $region37: #{_pheno_mlp_call.1} parent=1 // pred_fallthru
      _
    // Predicated region
    $region38: #{_pheno_mlp_call.1} parent=1 // pred_check
      _
    $region39: #{_pheno_mlp_call.1} parent=1 // pred_check_branch
      %86 = sbr.rel (0) target = $region41
    $region40: #{_pheno_mlp_call.1} parent=1 // pred_region
      %88 = dma.done [#allocation6], 1024
    $region41: #{_pheno_mlp_call.1} parent=1 // pred_fallthru
      _
    // Predicated region
    $region42: #{_pheno_mlp_call.1} parent=1 // pred_check
      _
    $region43: #{_pheno_mlp_call.1} parent=1 // pred_check_branch
      %90 = sbr.rel (0) target = $region45
    $region44: #{_pheno_mlp_call.1} parent=1 // pred_region
      %92 = dma.done [#allocation9], 1024
    $region45: #{_pheno_mlp_call.1} parent=1 // pred_fallthru
      _
    %v93 = vld [vmem:[#allocation2] sm:$0xff]
    %v94 = vld [vmem:[#allocation2 + $0x8] sm:$0xff]
    %v95 = vpack.c.bf16 %v94, %v93
    %v96 = vld [vmem:[#allocation5] sm:$0xf]
    %v97 = vld [vmem:[#allocation5 + $0x4] sm:$0xf]
    %v98 = vld [vmem:[#allocation5 + $0x8] sm:$0xf]
    %v99 = vld [vmem:[#allocation5 + $0xc] sm:$0xf]
    %v100 = vld [vmem:[#allocation5 + $0x10] sm:$0xf]
    %v101 = vld [vmem:[#allocation5 + $0x14] sm:$0xf]
    %v102 = vld [vmem:[#allocation5 + $0x18] sm:$0xf]
    %v103 = vld [vmem:[#allocation5 + $0x1c] sm:$0xf]
    %v104 = vld [vmem:[#allocation5 + $0x20] sm:$0xf]
    %v105 = vld [vmem:[#allocation5 + $0x24] sm:$0xf]
    %v106 = vld [vmem:[#allocation5 + $0x28] sm:$0xf]
    %v107 = vld [vmem:[#allocation5 + $0x2c] sm:$0xf]
    %v108 = vld [vmem:[#allocation5 + $0x30] sm:$0xf]
    %v109 = vld [vmem:[#allocation5 + $0x34] sm:$0xf]
    %v110 = vld [vmem:[#allocation5 + $0x38] sm:$0xf]
    %v111 = vld [vmem:[#allocation5 + $0x3c] sm:$0xf]
    %v112 = vld [vmem:[%s2] sm:$0x1]
    %v114 = vperm.slane %v112, 0
    %v132 = vunpack.c.l.b16 %v96
    %v133 = vunpack.c.l.b16 %v97
    %v134 = vunpack.c.l.b16 %v98
    %v135 = vunpack.c.l.b16 %v99
    %v136 = vunpack.c.l.b16 %v100
    %v137 = vunpack.c.l.b16 %v101
    %v138 = vunpack.c.l.b16 %v102
    %v139 = vunpack.c.l.b16 %v103
    %v140 = vunpack.c.l.b16 %v104
    %v141 = vunpack.c.l.b16 %v105
    %v142 = vunpack.c.l.b16 %v106
    %v143 = vunpack.c.l.b16 %v107
    %v144 = vunpack.c.l.b16 %v108
    %v145 = vunpack.c.l.b16 %v109
    %v146 = vunpack.c.l.b16 %v110
    %v147 = vunpack.c.l.b16 %v111
    %v148 = vpack.c.b16 %v133, %v132
    %v149 = vpack.c.b16 %v135, %v134
    %v150 = vpack.c.b16 %v137, %v136
    %v151 = vpack.c.b16 %v139, %v138
    %v152 = vpack.c.b16 %v141, %v140
    %v153 = vpack.c.b16 %v143, %v142
    %v154 = vpack.c.b16 %v145, %v144
    %v155 = vpack.c.b16 %v147, %v146
    %164 = vmatpush.bf16.msra.mxu0 %v155
    %165 = vmatpush.bf16.msra.mxu0 %v154
    %166 = vmatpush.bf16.msra.mxu0 %v153
    %167 = vmatpush.bf16.msra.mxu0 %v152
    %168 = vmatpush.bf16.msra.mxu0 %v151
    %169 = vmatpush.bf16.msra.mxu0 %v150
    %170 = vmatpush.bf16.msra.mxu0 %v149
    %171 = vmatpush.bf16.msra.mxu0 %v148
    %172 = vmatmul.bf16.gmra.mxu0 %v95
    %v173 = vpop.f32.mrf.mxu0
    %v174 = vadd.f32 %v114, %v173
    %v175 = vpop.f32.mrf.mxu0
    %v176 = vadd.f32 %v114, %v175
    %177 = vdwg.mxu0
    %v178 = vmax.f32 %v174, 0.0
    %v179 = vmax.f32 %v176, 0.0
    %v180 = vpack.c.bf16 %v179, %v178
    %v181 = vld [vmem:[#allocation7] sm:$0xf]
    %v182 = vld [vmem:[#allocation7 + $0x4] sm:$0xf]
    %v183 = vld [vmem:[#allocation7 + $0x8] sm:$0xf]
    %v184 = vld [vmem:[#allocation7 + $0xc] sm:$0xf]
    %v185 = vld [vmem:[#allocation7 + $0x10] sm:$0xf]
    %v186 = vld [vmem:[#allocation7 + $0x14] sm:$0xf]
    %v187 = vld [vmem:[#allocation7 + $0x18] sm:$0xf]
    %v188 = vld [vmem:[#allocation7 + $0x1c] sm:$0xf]
    %v189 = vld [vmem:[#allocation7 + $0x20] sm:$0xf]
    %v190 = vld [vmem:[#allocation7 + $0x24] sm:$0xf]
    %v191 = vld [vmem:[#allocation7 + $0x28] sm:$0xf]
    %v192 = vld [vmem:[#allocation7 + $0x2c] sm:$0xf]
    %v193 = vld [vmem:[#allocation7 + $0x30] sm:$0xf]
    %v194 = vld [vmem:[#allocation7 + $0x34] sm:$0xf]
    %v195 = vld [vmem:[#allocation7 + $0x38] sm:$0xf]
    %v196 = vld [vmem:[#allocation7 + $0x3c] sm:$0xf]
    %v197 = vld [vmem:[%s4] sm:$0x1]
    %v199 = vperm.slane %v197, 0
    %v217 = vunpack.c.l.b16 %v181
    %v218 = vunpack.c.l.b16 %v182
    %v219 = vunpack.c.l.b16 %v183
    %v220 = vunpack.c.l.b16 %v184
    %v221 = vunpack.c.l.b16 %v185
    %v222 = vunpack.c.l.b16 %v186
    %v223 = vunpack.c.l.b16 %v187
    %v224 = vunpack.c.l.b16 %v188
    %v225 = vunpack.c.l.b16 %v189
    %v226 = vunpack.c.l.b16 %v190
    %v227 = vunpack.c.l.b16 %v191
    %v228 = vunpack.c.l.b16 %v192
    %v229 = vunpack.c.l.b16 %v193
    %v230 = vunpack.c.l.b16 %v194
    %v231 = vunpack.c.l.b16 %v195
    %v232 = vunpack.c.l.b16 %v196
    %v233 = vpack.c.b16 %v218, %v217
    %v234 = vpack.c.b16 %v220, %v219
    %v235 = vpack.c.b16 %v222, %v221
    %v236 = vpack.c.b16 %v224, %v223
    %v237 = vpack.c.b16 %v226, %v225
    %v238 = vpack.c.b16 %v228, %v227
    %v239 = vpack.c.b16 %v230, %v229
    %v240 = vpack.c.b16 %v232, %v231
    %249 = vmatpush.bf16.msra.mxu0 %v240
    %250 = vmatpush.bf16.msra.mxu0 %v239
    %251 = vmatpush.bf16.msra.mxu0 %v238
    %252 = vmatpush.bf16.msra.mxu0 %v237
    %253 = vmatpush.bf16.msra.mxu0 %v236
    %254 = vmatpush.bf16.msra.mxu0 %v235
    %255 = vmatpush.bf16.msra.mxu0 %v234
    %256 = vmatpush.bf16.msra.mxu0 %v233
    %257 = vmatmul.bf16.gmra.mxu0 %v180
    %v258 = vpop.f32.mrf.mxu0
    %v259 = vadd.f32 %v199, %v258
    %v260 = vpop.f32.mrf.mxu0
    %v261 = vadd.f32 %v199, %v260
    %262 = vdwg.mxu0
    %v263 = vmax.f32 %v259, 0.0
    %v264 = vmax.f32 %v261, 0.0
    %v265 = vpack.c.bf16 %v264, %v263
    %v266 = vld [vmem:[#allocation8] sm:$0xf]
    %v267 = vld [vmem:[#allocation8 + $0x4] sm:$0xf]
    %v268 = vld [vmem:[#allocation8 + $0x8] sm:$0xf]
    %v269 = vld [vmem:[#allocation8 + $0xc] sm:$0xf]
    %v270 = vld [vmem:[#allocation8 + $0x10] sm:$0xf]
    %v271 = vld [vmem:[#allocation8 + $0x14] sm:$0xf]
    %v272 = vld [vmem:[#allocation8 + $0x18] sm:$0xf]
    %v273 = vld [vmem:[#allocation8 + $0x1c] sm:$0xf]
    %v274 = vld [vmem:[#allocation8 + $0x20] sm:$0xf]
    %v275 = vld [vmem:[#allocation8 + $0x24] sm:$0xf]
    %v276 = vld [vmem:[#allocation8 + $0x28] sm:$0xf]
    %v277 = vld [vmem:[#allocation8 + $0x2c] sm:$0xf]
    %v278 = vld [vmem:[#allocation8 + $0x30] sm:$0xf]
    %v279 = vld [vmem:[#allocation8 + $0x34] sm:$0xf]
    %v280 = vld [vmem:[#allocation8 + $0x38] sm:$0xf]
    %v281 = vld [vmem:[#allocation8 + $0x3c] sm:$0xf]
    %v282 = vld [vmem:[%s6] sm:$0x1]
    %v284 = vperm.slane %v282, 0
    %v302 = vunpack.c.l.b16 %v266
    %v303 = vunpack.c.l.b16 %v267
    %v304 = vunpack.c.l.b16 %v268
    %v305 = vunpack.c.l.b16 %v269
    %v306 = vunpack.c.l.b16 %v270
    %v307 = vunpack.c.l.b16 %v271
    %v308 = vunpack.c.l.b16 %v272
    %v309 = vunpack.c.l.b16 %v273
    %v310 = vunpack.c.l.b16 %v274
    %v311 = vunpack.c.l.b16 %v275
    %v312 = vunpack.c.l.b16 %v276
    %v313 = vunpack.c.l.b16 %v277
    %v314 = vunpack.c.l.b16 %v278
    %v315 = vunpack.c.l.b16 %v279
    %v316 = vunpack.c.l.b16 %v280
    %v317 = vunpack.c.l.b16 %v281
    %v318 = vpack.c.b16 %v303, %v302
    %v319 = vpack.c.b16 %v305, %v304
    %v320 = vpack.c.b16 %v307, %v306
    %v321 = vpack.c.b16 %v309, %v308
    %v322 = vpack.c.b16 %v311, %v310
    %v323 = vpack.c.b16 %v313, %v312
    %v324 = vpack.c.b16 %v315, %v314
    %v325 = vpack.c.b16 %v317, %v316
    %334 = vmatpush.bf16.msra.mxu0 %v325
    %335 = vmatpush.bf16.msra.mxu0 %v324
    %336 = vmatpush.bf16.msra.mxu0 %v323
    %337 = vmatpush.bf16.msra.mxu0 %v322
    %338 = vmatpush.bf16.msra.mxu0 %v321
    %339 = vmatpush.bf16.msra.mxu0 %v320
    %340 = vmatpush.bf16.msra.mxu0 %v319
    %341 = vmatpush.bf16.msra.mxu0 %v318
    %342 = vmatmul.bf16.gmra.mxu0 %v265
    %v343 = vpop.f32.mrf.mxu0
    %v344 = vadd.f32 %v284, %v343
    %v345 = vpop.f32.mrf.mxu0
    %v346 = vadd.f32 %v284, %v345
    %347 = vdwg.mxu0
    %v348 = vmax.f32 %v344, 0.0
    %v349 = vmax.f32 %v346, 0.0
    %350 = vst [vmem:[#allocation10] sm:$0xff] %v348
    %351 = vst [vmem:[#allocation10 + $0x8] sm:$0xff] %v349
    %v352 = vxor.u32 %v348, 2147483648
    %v353 = vxor.u32 %v349, 2147483648
    %v354 = vmul.f32 %v352, 1.442695
    %v355 = vpow.pop %v354
    %v356 = vmul.f32 %v353, 1.442695
    %v357 = vpow.pop %v356
    %v358 = vadd.f32 %v355, 1.0
    %v359 = vadd.f32 %v357, 1.0
    %v360 = vrcp.pop %v358
    %v361 = vmul.f32 %v358, %v360
    %v362 = vsub.f32 1.0, %v361
    %v363 = vmul.f32 %v360, %v362
    %v364 = vadd.f32 %v360, %v363
    %vm365 = vweird.f32 %v358
    %vm366 = vweird.f32 %v360
    %vm367 = vmor %vm365, %vm366
    %v368 = vsel %vm367, %v360, %v364
    %v369 = vand.u32 2147483647, %v358
    %vm370 = vcmp.eq.f32.partialorder %v369, 8.507059e+37
    %v371 = vand.u32 %v358, 2147483648
    %v372 = vor.u32 1.1754944e-38, %v371
    %v373 = vsel %vm370, %v372, %v368
    %v374 = vmul.f32 1.0, %v373
    %v375 = vrcp.pop %v359
    %v376 = vmul.f32 %v359, %v375
    %v377 = vsub.f32 1.0, %v376
    %v378 = vmul.f32 %v375, %v377
    %v379 = vadd.f32 %v375, %v378
    %vm380 = vweird.f32 %v359
    %vm381 = vweird.f32 %v375
    %vm382 = vmor %vm380, %vm381
    %v383 = vsel %vm382, %v375, %v379
    %v384 = vand.u32 2147483647, %v359
    %vm385 = vcmp.eq.f32.partialorder %v384, 8.507059e+37
    %v386 = vand.u32 %v359, 2147483648
    %v387 = vor.u32 1.1754944e-38, %v386
    %v388 = vsel %vm385, %v387, %v383
    %v389 = vmul.f32 1.0, %v388
    %390 = vst [vmem:[#allocation11] sm:$0xff] %v374
    %391 = vst [vmem:[#allocation11 + $0x8] sm:$0xff] %v389
    // Predicated region
    $region46: #{_pheno_mlp_call.1} parent=1 // pred_check
      _
    $region47: #{_pheno_mlp_call.1} parent=1 // pred_check_branch
      %393 = sbr.rel (0) target = $region49
    $region48: #{_pheno_mlp_call.1} parent=1 // pred_region
      %395 = vsyncadd [#allocation4], 0
      %s396 = sshll.u32 [#allocation10], 4
      %s397 = int_to_ptr.vmem [resolvable:$true] %s396
      %s398 = sshll.u32 %s7, 4
      %s399 = int_to_ptr.hbm [resolvable:$true] %s398
      %404 = dma.vmem_to_hbm [thread:$0]  %s397, 256, %s399, [#allocation4], 128, 128, 8
    $region49: #{_pheno_mlp_call.1} parent=1 // pred_fallthru
      _
    // Predicated region
    $region50: #{_pheno_mlp_call.1} parent=1 // pred_check
      _
    $region51: #{_pheno_mlp_call.1} parent=1 // pred_check_branch
      %406 = sbr.rel (0) target = $region53
    $region52: #{_pheno_mlp_call.1} parent=1 // pred_region
      %408 = vsyncadd [#allocation12], 0
      %s409 = sshll.u32 [#allocation11], 4
      %s410 = int_to_ptr.vmem [resolvable:$true] %s409
      %s411 = sshll.u32 %s8, 4
      %s412 = int_to_ptr.hbm [resolvable:$true] %s411
      %417 = dma.vmem_to_hbm [thread:$0]  %s410, 256, %s412, [#allocation12], 128, 128, 8
    $region53: #{_pheno_mlp_call.1} parent=1 // pred_fallthru
      _
    // Predicated region
    $region54: #{_pheno_mlp_call.1} parent=1 // pred_check
      _
    $region55: #{_pheno_mlp_call.1} parent=1 // pred_check_branch
      %419 = sbr.rel (0) target = $region57
    $region56: #{_pheno_mlp_call.1} parent=1 // pred_region
      %421 = dma.done [#allocation4], 256
    $region57: #{_pheno_mlp_call.1} parent=1 // pred_fallthru
      _
    // Predicated region
    $region58: #{_pheno_mlp_call.1} parent=1 // pred_check
      _
    $region59: #{_pheno_mlp_call.1} parent=1 // pred_check_branch
      %423 = sbr.rel (0) target = $region61
    $region60: #{_pheno_mlp_call.1} parent=1 // pred_region
      %425 = dma.done [#allocation12], 256
    $region61: #{_pheno_mlp_call.1} parent=1 // pred_fallthru
      _
    %426 = vsyncpa [#allocation3], 1
    %427 = vsyncpa [#allocation6], 1
    %428 = vsyncpa [#allocation9], 1
    %429 = vsyncpa [#allocation4], 1
    %430 = vsyncpa [#allocation12], 1

</llo_original>
